<compile_context>
chip_gen: v5e
topology: v5e:2x2
jax: 0.10.0
libtpu: 0.0.40
codegen_flags: <defaults>
</compile_context>

<pallas_src>
import functools

import jax
import jax.numpy as jnp
from jax import lax
from jax.experimental import pallas as pl
from jax.experimental.pallas import tpu as pltpu


# ---------------------------------------------------------------------------
# Fused multi-step decoder kernel (one grid step == one decoder forward step)
# ---------------------------------------------------------------------------
def _decoder_kernel(method, L,
                    tok_ref,                       # (T, B) int32, SMEM (scalar prefetch)
                    h0_ref,                        # (1, B, H)   initial hidden
                    enc_ref,                       # (L*B, H)    dense encoder outputs
                    emb_ref,                       # (V, H)      embedding table
                    wg_ref,                        # (2H+2, 3H)  [W_ih.T ; W_hh.T ; b_ih ; b_hh]
                    wp_ref,                        # (K, H)      [W_concat.T ; attn W's ; biases]
                    wo_ref,                        # (H+1, V)    [W_out.T ; b_out]
                    probs_ref,                     # out: (1, B, V) block of (T, B, V)
                    hid_ref,                       # out: (1, B, H) final hidden (resident)
                    h_scr):                        # scratch: (B, H) carried hidden
    t = pl.program_id(0)
    B = h0_ref.shape[1]
    H = h0_ref.shape[2]
    V = emb_ref.shape[0]
    LB = L * B
    f32 = jnp.float32

    @pl.when(t == 0)
    def _():
        h_scr[...] = h0_ref[0]

    # ---- embedding lookup: one-hot MXU matmul from SMEM token ids ----
    lane_ids = lax.broadcasted_iota(jnp.int32, (1, V), 1)
    rows = [(lane_ids == tok_ref[t, b]).astype(f32) for b in range(B)]   # B small & static
    onehot = jnp.concatenate(rows, axis=0)                               # (B, V)
    x = jnp.dot(onehot, emb_ref[...], preferred_element_type=f32)        # (B, H)
    # TODO(synk): embedding_dropout is stochastic; treated as eval-mode identity.

    # ---- single-layer GRU step: 2 fused gate matmuls + lane slices (r,z,n) ----
    h_prev = h_scr[...]                                                  # (B, H)
    gi = jnp.dot(x, wg_ref[0:H, :], preferred_element_type=f32) \
        + wg_ref[2 * H:2 * H + 1, :]                                     # x@W_ih.T + b_ih
    gh = jnp.dot(h_prev, wg_ref[H:2 * H, :], preferred_element_type=f32) \
        + wg_ref[2 * H + 1:2 * H + 2, :]                                 # h@W_hh.T + b_hh
    r = jax.nn.sigmoid(gi[:, 0:H] + gh[:, 0:H])
    z = jax.nn.sigmoid(gi[:, H:2 * H] + gh[:, H:2 * H])
    n = jnp.tanh(gi[:, 2 * H:3 * H] + r * gh[:, 2 * H:3 * H])
    h_new = (1.0 - z) * n + z * h_prev                                   # (B, H) == rnn_output

    # ---- Luong attention on dense (L*B, H) encoder tiles ----
    enc = enc_ref[...]                                                   # (L*B, H)

    # batch-selection masks: mask[i, b] (or [b, j]) = 1 iff row index % B == b.
    # Built from iotas + L static compares (no integer mod, no reshapes).
    def batch_mask(shape, idx_axis, batch_axis):
        ii = lax.broadcasted_iota(jnp.int32, shape, idx_axis)
        bb = lax.broadcasted_iota(jnp.int32, shape, batch_axis)
        m = ii == bb
        for l in range(1, L):
            m = jnp.logical_or(m, ii == bb + l * B)
        return m.astype(f32)

    selT = batch_mask((LB, B), 0, 1)                                     # (L*B, B)
    sel = batch_mask((B, LB), 1, 0)                                      # (B, L*B)

    if method == 'dot':
        bias_off = 2 * H
        qe = h_new
        qe_rep = jnp.dot(selT, qe, preferred_element_type=f32)           # broadcast over L
        scores = jnp.sum(qe_rep * enc, axis=1, keepdims=True)            # (L*B, 1)
    elif method == 'general':
        bias_off = 3 * H
        # sum_h q_h (enc@W.T + b)_h == sum_k enc_k (q@W)_k + q.b ; the q.b term is
        # constant over L and cancels in the softmax -> dropped.
        qe = jnp.dot(h_new, wp_ref[2 * H:3 * H, :], preferred_element_type=f32)
        qe_rep = jnp.dot(selT, qe, preferred_element_type=f32)           # (L*B, H)
        scores = jnp.sum(qe_rep * enc, axis=1, keepdims=True)            # (L*B, 1)
    else:  # concat
        bias_off = 4 * H
        w_ah = wp_ref[2 * H:3 * H, :]
        w_ae = wp_ref[3 * H:4 * H, :]
        b_attn = wp_ref[bias_off + 1:bias_off + 2, :]
        v_attn = wp_ref[bias_off + 2:bias_off + 3, :]
        hid_proj = jnp.dot(h_new, w_ah, preferred_element_type=f32)      # (B, H)
        hid_rep = jnp.dot(selT, hid_proj, preferred_element_type=f32)    # (L*B, H)
        enc_proj = jnp.dot(enc, w_ae, preferred_element_type=f32)        # one MXU matmul
        energy = jnp.tanh(hid_rep + enc_proj + b_attn)                   # (L*B, H)
        scores = jnp.sum(v_attn * energy, axis=1, keepdims=True)         # (L*B, 1)

    # ---- softmax over L fused with the context "bmm":
    #      context_b = sum_l e_lb * enc_lb / sum_l e_lb  (exact divides for parity)
    m = jnp.max(scores, axis=0, keepdims=True)       # global max: softmax-invariant shift
    e = jnp.exp(scores - m)                          # (L*B, 1)
    num = jnp.dot(sel, e * enc, preferred_element_type=f32)              # (B, H)
    den = jnp.dot(sel, e, preferred_element_type=f32)                    # (B, 1)
    context = num / den                                                  # (B, H)

    # ---- concat Linear: single matmul on the (B, 2H) lane tile + tanh ----
    cat = jnp.concatenate([h_new, context], axis=1)                      # (B, 2H)
    c_out = jnp.tanh(jnp.dot(cat, wp_ref[0:2 * H, :], preferred_element_type=f32)
                     + wp_ref[bias_off:bias_off + 1, :])                 # (B, H)

    # ---- output projection + vocab softmax (lane-dense V) ----
    logits = jnp.dot(c_out, wo_ref[0:H, :], preferred_element_type=f32) \
        + wo_ref[H:H + 1, :]                                             # (B, V)
    lm = jnp.max(logits, axis=1, keepdims=True)
    le = jnp.exp(logits - lm)
    probs = le / jnp.sum(le, axis=1, keepdims=True)
    # TODO(synk): pl.reciprocal(approx=True) would move the divides to the EUP slot;
    # kept exact to preserve bit-level parity with the reference.

    probs_ref[0] = probs.astype(probs_ref.dtype)
    hid_ref[0] = h_new.astype(hid_ref.dtype)
    h_scr[...] = h_new


# ---------------------------------------------------------------------------
# Python wrapper holding parameters (PyTorch (out,in) Linear convention)
# ---------------------------------------------------------------------------
class LuongAttnDecoderRNNPallas:
    def __init__(self, attn_model, hidden_size, output_size, n_layers=1,
                 dropout=0.1, key=None):
        if attn_model not in ('dot', 'general', 'concat'):
            raise ValueError(attn_model, 'is not an appropriate attention method.')
        if n_layers != 1:
            raise NotImplementedError('fused kernel implements n_layers=1 (tutorial default)')
        # TODO(synk): dropout is stochastic; this kernel runs the eval-mode forward.
        self.method = attn_model
        self.hidden_size = hidden_size
        self.output_size = output_size

        H, V = hidden_size, output_size
        if key is None:
            key = jax.random.PRNGKey(0)
        ks = jax.random.split(key, 12)

        def uni(k, shape, fan_in):
            bound = 1.0 / (fan_in ** 0.5)
            return jax.random.uniform(k, shape, jnp.float32, -bound, bound)

        p = {}
        p['emb'] = jax.random.normal(ks[0], (V, H), jnp.float32)   # nn.Embedding(V, H)
        # GRU, single layer, PyTorch row order [r; z; n]
        p['w_ih'] = uni(ks[1], (3 * H, H), H)
        p['w_hh'] = uni(ks[2], (3 * H, H), H)
        p['b_ih'] = uni(ks[3], (3 * H,), H)
        p['b_hh'] = uni(ks[4], (3 * H,), H)
        # concat Linear (H, 2H) and out Linear (V, H)
        p['w_concat'] = uni(ks[5], (H, 2 * H), 2 * H)
        p['b_concat'] = uni(ks[6], (H,), 2 * H)
        p['w_out'] = uni(ks[7], (V, H), H)
        p['b_out'] = uni(ks[8], (V,), H)
        if attn_model == 'general':
            p['w_attn'] = uni(ks[9], (H, H), H)
            p['b_attn'] = uni(ks[10], (H,), H)
        elif attn_model == 'concat':
            p['w_attn'] = uni(ks[9], (H, 2 * H), 2 * H)
            p['b_attn'] = uni(ks[10], (H,), 2 * H)
            # torch.FloatTensor(H) is uninitialized in PyTorch; deterministic here.
            p['v'] = jax.random.normal(ks[11], (H,), jnp.float32)
        self.params = p

        # ---- hoisted, consolidated kernel parameters (computed ONCE) ----
        # GRU stack (2H+2, 3H): [W_ih.T ; W_hh.T ; b_ih ; b_hh]
        self._w_gru = jnp.concatenate(
            [p['w_ih'].T, p['w_hh'].T,
             p['b_ih'].reshape(1, 3 * H), p['b_hh'].reshape(1, 3 * H)], axis=0)

        # H-width stack: [W_concat.T (2H) ; method weights ; b_concat (; b_attn ; v)]
        proj_rows = [p['w_concat'].T]                                  # (2H, H)
        if attn_model == 'general':
            proj_rows += [p['w_attn']]                                 # used as q @ W
        elif attn_model == 'concat':
            proj_rows += [p['w_attn'][:, :H].T, p['w_attn'][:, H:].T]
        proj_rows += [p['b_concat'].reshape(1, H)]
        if attn_model == 'concat':
            proj_rows += [p['b_attn'].reshape(1, H), p['v'].reshape(1, H)]
        self._w_proj = jnp.concatenate(proj_rows, axis=0)

        # output stack (H+1, V): [W_out.T ; b_out]
        self._w_out = jnp.concatenate([p['w_out'].T, p['b_out'].reshape(1, V)], axis=0)
        self._w_emb = p['emb']

    def __call__(self, input_step, last_hidden, encoder_outputs):
        """input_step: (T, B) int32 token ids (T=1 == module forward, T>1 runs the
        whole teacher-forced decode in ONE pallas_call with resident weights).
        last_hidden: (1, B, H).  encoder_outputs: (L, B, H) (PyTorch layout)."""
        T, B = input_step.shape
        L = encoder_outputs.shape[0]
        H, V = self.hidden_size, self.output_size

        # dense encoder tiles: (L, B, H) -> (L*B, H) is a free contiguous reshape.
        enc2d = encoder_outputs.reshape(L * B, H)

        kernel = functools.partial(_decoder_kernel, self.method, L)

        grid_spec = pltpu.PrefetchScalarGridSpec(
            num_scalar_prefetch=1,
            grid=(T,),
            in_specs=[
                pl.BlockSpec((1, B, H), lambda t, tok: (0, 0, 0)),          # h0 (resident)
                pl.BlockSpec((L * B, H), lambda t, tok: (0, 0)),            # enc (resident)
                pl.BlockSpec(self._w_emb.shape, lambda t, tok: (0, 0)),     # emb (resident)
                pl.BlockSpec(self._w_gru.shape, lambda t, tok: (0, 0)),     # GRU stack
                pl.BlockSpec(self._w_proj.shape, lambda t, tok: (0, 0)),    # attn/concat stack
                pl.BlockSpec(self._w_out.shape, lambda t, tok: (0, 0)),     # out stack
            ],
            out_specs=(
                pl.BlockSpec((1, B, V), lambda t, tok: (t, 0, 0)),          # per-step probs
                pl.BlockSpec((1, B, H), lambda t, tok: (0, 0, 0)),          # final hidden
            ),
            scratch_shapes=[pltpu.VMEM((B, H), jnp.float32)],               # carried hidden
        )

        probs, hidden = pl.pallas_call(
            kernel,
            out_shape=(jax.ShapeDtypeStruct((T, B, V), jnp.float32),
                       jax.ShapeDtypeStruct((1, B, H), jnp.float32)),
            grid_spec=grid_spec,
            compiler_params=pltpu.CompilerParams(
                dimension_semantics=("arbitrary",)),                        # sequential steps
        )(input_step.astype(jnp.int32), last_hidden, enc2d,
          self._w_emb, self._w_gru, self._w_proj, self._w_out)
        return probs, hidden


# ---------------------------------------------------------------------------
# Pure-JAX reference mirroring the PyTorch LuongAttnDecoderRNN.forward (eval)
# ---------------------------------------------------------------------------
def decoder_reference(module, input_step, last_hidden, encoder_outputs):
    p = module.params
    H = module.hidden_size
    x = p['emb'][input_step[0]]                        # (B, H); dropout = identity (eval)
    h = last_hidden[0]                                 # (B, H)
    gi = x @ p['w_ih'].T + p['b_ih']                   # (B, 3H)
    gh = h @ p['w_hh'].T + p['b_hh']
    i_r, i_z, i_n = gi[:, :H], gi[:, H:2 * H], gi[:, 2 * H:]
    h_r, h_z, h_n = gh[:, :H], gh[:, H:2 * H], gh[:, 2 * H:]
    r = jax.nn.sigmoid(i_r + h_r)
    z = jax.nn.sigmoid(i_z + h_z)
    n = jnp.tanh(i_n + r * h_n)
    h_new = (1.0 - z) * n + z * h                      # (B, H)
    rnn_output = h_new[None]                           # (1, B, H)

    if module.method == 'dot':
        scores = jnp.sum(rnn_output * encoder_outputs, axis=2)            # (L, B)
    elif module.method == 'general':
        energy = encoder_outputs @ p['w_attn'].T + p['b_attn']
        scores = jnp.sum(rnn_output * energy, axis=2)
    else:
        L = encoder_outputs.shape[0]
        hid_exp = jnp.broadcast_to(rnn_output, (L,) + rnn_output.shape[1:])
        cat = jnp.concatenate([hid_exp, encoder_outputs], axis=2)
        energy = jnp.tanh(cat @ p['w_attn'].T + p['b_attn'])
        scores = jnp.sum(p['v'] * energy, axis=2)

    attn_w = jax.nn.softmax(scores.T, axis=1)[:, None, :]                 # (B, 1, L)
    enc_bm = jnp.transpose(encoder_outputs, (1, 0, 2))                    # (B, L, H)
    context = jnp.einsum('bol,blh->boh', attn_w, enc_bm)[:, 0, :]         # (B, H)
    concat_input = jnp.concatenate([h_new, context], axis=1)              # (B, 2H)
    concat_output = jnp.tanh(concat_input @ p['w_concat'].T + p['b_concat'])
    logits = concat_output @ p['w_out'].T + p['b_out']
    output = jax.nn.softmax(logits, axis=1)[None]                         # (1, B, V)
    return output, h_new[None]


if __name__ == "__main__":
    B, L, H, V, T = 2, 8, 32, 128, 4
    key = jax.random.PRNGKey(0)
    k_in, k_seq, k_h, k_e, k_dot, k_gen, k_cat = jax.random.split(key, 7)

    input_step = jax.random.randint(k_in, (1, B), 0, V, dtype=jnp.int32)   # (1, B)
    token_seq = jax.random.randint(k_seq, (T, B), 0, V, dtype=jnp.int32)   # (T, B)
    last_hidden = jax.random.normal(k_h, (1, B, H), jnp.float32)           # (1, B, H)
    encoder_outputs = jax.random.normal(k_e, (L, B, H), jnp.float32)       # (L, B, H)

    ok = True
    for method, mk in (('dot', k_dot), ('general', k_gen), ('concat', k_cat)):
        dec = LuongAttnDecoderRNNPallas(method, H, V, n_layers=1, key=mk)

        # --- single decoder step (module-equivalent forward) ---
        out, hid = dec(input_step, last_hidden, encoder_outputs)
        out = jax.block_until_ready(out)
        hid = jax.block_until_ready(hid)
        ref_out, ref_hid = decoder_reference(dec, input_step, last_hidden, encoder_outputs)
        assert out.shape == (1, B, V), (method, out.shape)
        assert hid.shape == (1, B, H), (method, hid.shape)
        if not (jnp.allclose(out, ref_out, rtol=1e-5, atol=1e-5)
                and jnp.allclose(hid, ref_hid, rtol=1e-5, atol=1e-5)):
            ok = False
            print(f"single-step mismatch for method={method}: "
                  f"dout={float(jnp.max(jnp.abs(out - ref_out))):.2e} "
                  f"dhid={float(jnp.max(jnp.abs(hid - ref_hid))):.2e}")

        # --- T-step teacher-forced decode in ONE pallas_call (resident weights) ---
        outs, hid_T = dec(token_seq, last_hidden, encoder_outputs)
        outs = jax.block_until_ready(outs)
        hid_T = jax.block_until_ready(hid_T)
        h_ref = last_hidden
        ref_steps = []
        for t in range(T):
            o_ref, h_ref = decoder_reference(dec, token_seq[t:t + 1], h_ref, encoder_outputs)
            ref_steps.append(o_ref[0])
        ref_T = jnp.stack(ref_steps, axis=0)                               # (T, B, V)
        if not (jnp.allclose(outs, ref_T, rtol=1e-5, atol=1e-5)
                and jnp.allclose(hid_T, h_ref, rtol=1e-5, atol=1e-5)):
            ok = False
            print(f"multi-step mismatch for method={method}: "
                  f"dout={float(jnp.max(jnp.abs(outs - ref_T))):.2e} "
                  f"dhid={float(jnp.max(jnp.abs(hid_T - h_ref))):.2e}")

    if ok:
        print("KERNEL_OK")
</pallas_src>

<mosaic_0001>
module attributes {stable_mosaic.version = 11 : i64} {
  func.func @_decoder_kernel(%arg0: i32, %arg1: memref<1x2xi32, #tpu.memory_space<smem>>, %arg2: memref<1x2x32xf32, #tpu.memory_space<vmem>>, %arg3: memref<16x32xf32, #tpu.memory_space<vmem>>, %arg4: memref<128x32xf32, #tpu.memory_space<vmem>>, %arg5: memref<66x96xf32, #tpu.memory_space<vmem>>, %arg6: memref<65x32xf32, #tpu.memory_space<vmem>>, %arg7: memref<33x128xf32, #tpu.memory_space<vmem>>, %arg8: memref<1x2x128xf32, #tpu.memory_space<vmem>>, %arg9: memref<1x2x32xf32, #tpu.memory_space<vmem>>, %arg10: memref<2x32xf32, #tpu.memory_space<vmem>>) attributes {dimension_semantics = [#tpu.dimension_semantics<arbitrary>], iteration_bounds = array<i64: 1>, scalar_prefetch = 1 : i64, scratch_operands = 1 : i64, tpu.core_type = #tpu.core_type<tc>, window_params = [{pipeline_mode = #tpu.pipeline_mode<synchronous>, transform_indices = @transform_0, window_bounds = array<i64: 1, 2, 32>}, {pipeline_mode = #tpu.pipeline_mode<synchronous>, transform_indices = @transform_1, window_bounds = array<i64: 16, 32>}, {pipeline_mode = #tpu.pipeline_mode<synchronous>, transform_indices = @transform_2, window_bounds = array<i64: 128, 32>}, {pipeline_mode = #tpu.pipeline_mode<synchronous>, transform_indices = @transform_3, window_bounds = array<i64: 66, 96>}, {pipeline_mode = #tpu.pipeline_mode<synchronous>, transform_indices = @transform_4, window_bounds = array<i64: 65, 32>}, {pipeline_mode = #tpu.pipeline_mode<synchronous>, transform_indices = @transform_5, window_bounds = array<i64: 33, 128>}, {transform_indices = @transform_6, window_bounds = array<i64: 1, 2, 128>}, {pipeline_mode = #tpu.pipeline_mode<synchronous>, transform_indices = @transform_7, window_bounds = array<i64: 1, 2, 32>}]} {
    %c0_i32 = arith.constant 0 : i32
    %0 = arith.cmpi eq, %arg0, %c0_i32 : i32
    %1 = arith.extui %0 : i1 to i32
    %c0_i32_0 = arith.constant 0 : i32
    %2 = arith.cmpi ne, %1, %c0_i32_0 : i32
    scf.if %2 {
      %c0_49 = arith.constant 0 : index
      %c0_50 = arith.constant 0 : index
      %c0_51 = arith.constant 0 : index
      %166 = vector.load %arg2[%c0_49, %c0_50, %c0_51] : memref<1x2x32xf32, #tpu.memory_space<vmem>>, vector<1x2x32xf32>
      %167 = vector.shape_cast %166 : vector<1x2x32xf32> to vector<2x32xf32>
      %c0_52 = arith.constant 0 : index
      %c0_53 = arith.constant 0 : index
      %168 = vector.load %arg10[%c0_52, %c0_53] : memref<2x32xf32, #tpu.memory_space<vmem>>, vector<2x32xf32>
      tpu.vector_store %arg10[%c0_52, %c0_53], %167 {strides = array<i32>} : memref<2x32xf32, #tpu.memory_space<vmem>>, vector<2x32xf32>,
    } else {
    }
    %3 = tpu.iota {dimensions = array<i32: 1>} : vector<1x128xi32>
    %4 = arith.index_cast %arg0 : i32 to index
    %c0 = arith.constant 0 : index
    %5 = memref.load %arg1[%4, %c0] : memref<1x2xi32, #tpu.memory_space<smem>>
    %6 = vector.broadcast %5 : i32 to vector<1x128xi32>
    %7 = arith.cmpi eq, %3, %6 : vector<1x128xi32>
    %8 = arith.extui %7 : vector<1x128xi1> to vector<1x128xi32>
    %9 = arith.sitofp %8 : vector<1x128xi32> to vector<1x128xf32>
    %10 = arith.index_cast %arg0 : i32 to index
    %c1 = arith.constant 1 : index
    %11 = memref.load %arg1[%10, %c1] : memref<1x2xi32, #tpu.memory_space<smem>>
    %12 = vector.broadcast %11 : i32 to vector<1x128xi32>
    %13 = arith.cmpi eq, %3, %12 : vector<1x128xi32>
    %14 = arith.extui %13 : vector<1x128xi1> to vector<1x128xi32>
    %15 = arith.sitofp %14 : vector<1x128xi32> to vector<1x128xf32>
    %16 = tpu.concatenate %9, %15 in 0 : vector<1x128xf32>, vector<1x128xf32> -> vector<2x128xf32>
    %c0_1 = arith.constant 0 : index
    %c0_2 = arith.constant 0 : index
    %17 = vector.load %arg4[%c0_1, %c0_2] : memref<128x32xf32, #tpu.memory_space<vmem>>, vector<128x32xf32>
    %cst = arith.constant dense<0.000000e+00> : vector<2x32xf32>
    %18 = tpu.matmul %16, %17, %cst {dimension_numbers = #tpu.dot_dimension_numbers<[1], [0], [0], [1], [0, 0, 1, 1], [], []>} : vector<2x128xf32>, vector<128x32xf32>, vector<2x32xf32> -> vector<2x32xf32>
    %c0_3 = arith.constant 0 : index
    %c0_4 = arith.constant 0 : index
    %19 = vector.load %arg10[%c0_3, %c0_4] : memref<2x32xf32, #tpu.memory_space<vmem>>, vector<2x32xf32>
    %c0_5 = arith.constant 0 : index
    %c0_6 = arith.constant 0 : index
    %20 = vector.load %arg5[%c0_5, %c0_6] : memref<66x96xf32, #tpu.memory_space<vmem>>, vector<32x96xf32>
    %cst_7 = arith.constant dense<0.000000e+00> : vector<2x96xf32>
    %21 = tpu.matmul %18, %20, %cst_7 {dimension_numbers = #tpu.dot_dimension_numbers<[1], [0], [0], [1], [0, 0, 1, 1], [], []>} : vector<2x32xf32>, vector<32x96xf32>, vector<2x96xf32> -> vector<2x96xf32>
    %c64 = arith.constant 64 : index
    %c0_8 = arith.constant 0 : index
    %22 = vector.load %arg5[%c64, %c0_8] : memref<66x96xf32, #tpu.memory_space<vmem>>, vector<1x96xf32>
    %23 = vector.broadcast %22 : vector<1x96xf32> to vector<2x96xf32>
    %24 = arith.addf %21, %23 : vector<2x96xf32>
    %c32 = arith.constant 32 : index
    %c0_9 = arith.constant 0 : index
    %25 = vector.load %arg5[%c32, %c0_9] : memref<66x96xf32, #tpu.memory_space<vmem>>, vector<32x96xf32>
    %cst_10 = arith.constant dense<0.000000e+00> : vector<2x96xf32>
    %26 = tpu.matmul %19, %25, %cst_10 {dimension_numbers = #tpu.dot_dimension_numbers<[1], [0], [0], [1], [0, 0, 1, 1], [], []>} : vector<2x32xf32>, vector<32x96xf32>, vector<2x96xf32> -> vector<2x96xf32>
    %c65 = arith.constant 65 : index
    %c0_11 = arith.constant 0 : index
    %27 = vector.load %arg5[%c65, %c0_11] : memref<66x96xf32, #tpu.memory_space<vmem>>, vector<1x96xf32>
    %28 = vector.broadcast %27 : vector<1x96xf32> to vector<2x96xf32>
    %29 = arith.addf %26, %28 : vector<2x96xf32>
    %30 = vector.extract_strided_slice %24 {offsets = [0, 0], sizes = [2, 32], strides = [1, 1]} : vector<2x96xf32> to vector<2x32xf32>
    %31 = vector.extract_strided_slice %29 {offsets = [0, 0], sizes = [2, 32], strides = [1, 1]} : vector<2x96xf32> to vector<2x32xf32>
    %32 = arith.addf %30, %31 : vector<2x32xf32>
    %33 = arith.negf %32 : vector<2x32xf32>
    %34 = math.exp %33 : vector<2x32xf32>
    %cst_12 = arith.constant 1.000000e+00 : f32
    %35 = vector.broadcast %cst_12 : f32 to vector<2x32xf32>
    %36 = arith.addf %35, %34 : vector<2x32xf32>
    %37 = arith.divf %35, %36 : vector<2x32xf32>
    %38 = vector.extract_strided_slice %24 {offsets = [0, 32], sizes = [2, 32], strides = [1, 1]} : vector<2x96xf32> to vector<2x32xf32>
    %39 = vector.extract_strided_slice %29 {offsets = [0, 32], sizes = [2, 32], strides = [1, 1]} : vector<2x96xf32> to vector<2x32xf32>
    %40 = arith.addf %38, %39 : vector<2x32xf32>
    %41 = arith.negf %40 : vector<2x32xf32>
    %42 = math.exp %41 : vector<2x32xf32>
    %cst_13 = arith.constant 1.000000e+00 : f32
    %43 = vector.broadcast %cst_13 : f32 to vector<2x32xf32>
    %44 = arith.addf %43, %42 : vector<2x32xf32>
    %45 = arith.divf %43, %44 : vector<2x32xf32>
    %46 = vector.extract_strided_slice %24 {offsets = [0, 64], sizes = [2, 32], strides = [1, 1]} : vector<2x96xf32> to vector<2x32xf32>
    %47 = vector.extract_strided_slice %29 {offsets = [0, 64], sizes = [2, 32], strides = [1, 1]} : vector<2x96xf32> to vector<2x32xf32>
    %48 = arith.mulf %37, %47 : vector<2x32xf32>
    %49 = arith.addf %46, %48 : vector<2x32xf32>
    %50 = math.tanh %49 : vector<2x32xf32>
    %cst_14 = arith.constant 1.000000e+00 : f32
    %51 = vector.broadcast %cst_14 : f32 to vector<2x32xf32>
    %52 = arith.subf %51, %45 : vector<2x32xf32>
    %53 = arith.mulf %52, %50 : vector<2x32xf32>
    %54 = arith.mulf %45, %19 : vector<2x32xf32>
    %55 = arith.addf %53, %54 : vector<2x32xf32>
    %c0_15 = arith.constant 0 : index
    %c0_16 = arith.constant 0 : index
    %56 = vector.load %arg3[%c0_15, %c0_16] : memref<16x32xf32, #tpu.memory_space<vmem>>, vector<16x32xf32>
    %57 = tpu.iota {dimensions = array<i32: 0>} : vector<16x2xi32>
    %58 = tpu.iota {dimensions = array<i32: 1>} : vector<16x2xi32>
    %59 = arith.cmpi eq, %57, %58 : vector<16x2xi32>
    %c2_i32 = arith.constant 2 : i32
    %60 = vector.broadcast %c2_i32 : i32 to vector<16x2xi32>
    %61 = arith.addi %58, %60 : vector<16x2xi32>
    %62 = arith.cmpi eq, %57, %61 : vector<16x2xi32>
    %63 = arith.ori %59, %62 : vector<16x2xi1>
    %c4_i32 = arith.constant 4 : i32
    %64 = vector.broadcast %c4_i32 : i32 to vector<16x2xi32>
    %65 = arith.addi %58, %64 : vector<16x2xi32>
    %66 = arith.cmpi eq, %57, %65 : vector<16x2xi32>
    %67 = arith.ori %63, %66 : vector<16x2xi1>
    %c6_i32 = arith.constant 6 : i32
    %68 = vector.broadcast %c6_i32 : i32 to vector<16x2xi32>
    %69 = arith.addi %58, %68 : vector<16x2xi32>
    %70 = arith.cmpi eq, %57, %69 : vector<16x2xi32>
    %71 = arith.ori %67, %70 : vector<16x2xi1>
    %c8_i32 = arith.constant 8 : i32
    %72 = vector.broadcast %c8_i32 : i32 to vector<16x2xi32>
    %73 = arith.addi %58, %72 : vector<16x2xi32>
    %74 = arith.cmpi eq, %57, %73 : vector<16x2xi32>
    %75 = arith.ori %71, %74 : vector<16x2xi1>
    %c10_i32 = arith.constant 10 : i32
    %76 = vector.broadcast %c10_i32 : i32 to vector<16x2xi32>
    %77 = arith.addi %58, %76 : vector<16x2xi32>
    %78 = arith.cmpi eq, %57, %77 : vector<16x2xi32>
    %79 = arith.ori %75, %78 : vector<16x2xi1>
    %c12_i32 = arith.constant 12 : i32
    %80 = vector.broadcast %c12_i32 : i32 to vector<16x2xi32>
    %81 = arith.addi %58, %80 : vector<16x2xi32>
    %82 = arith.cmpi eq, %57, %81 : vector<16x2xi32>
    %83 = arith.ori %79, %82 : vector<16x2xi1>
    %c14_i32 = arith.constant 14 : i32
    %84 = vector.broadcast %c14_i32 : i32 to vector<16x2xi32>
    %85 = arith.addi %58, %84 : vector<16x2xi32>
    %86 = arith.cmpi eq, %57, %85 : vector<16x2xi32>
    %87 = arith.ori %83, %86 : vector<16x2xi1>
    %88 = arith.extui %87 : vector<16x2xi1> to vector<16x2xi32>
    %89 = arith.sitofp %88 : vector<16x2xi32> to vector<16x2xf32>
    %90 = tpu.iota {dimensions = array<i32: 1>} : vector<2x16xi32>
    %91 = tpu.iota {dimensions = array<i32: 0>} : vector<2x16xi32>
    %92 = arith.cmpi eq, %90, %91 : vector<2x16xi32>
    %c2_i32_17 = arith.constant 2 : i32
    %93 = vector.broadcast %c2_i32_17 : i32 to vector<2x16xi32>
    %94 = arith.addi %91, %93 : vector<2x16xi32>
    %95 = arith.cmpi eq, %90, %94 : vector<2x16xi32>
    %96 = arith.ori %92, %95 : vector<2x16xi1>
    %c4_i32_18 = arith.constant 4 : i32
    %97 = vector.broadcast %c4_i32_18 : i32 to vector<2x16xi32>
    %98 = arith.addi %91, %97 : vector<2x16xi32>
    %99 = arith.cmpi eq, %90, %98 : vector<2x16xi32>
    %100 = arith.ori %96, %99 : vector<2x16xi1>
    %c6_i32_19 = arith.constant 6 : i32
    %101 = vector.broadcast %c6_i32_19 : i32 to vector<2x16xi32>
    %102 = arith.addi %91, %101 : vector<2x16xi32>
    %103 = arith.cmpi eq, %90, %102 : vector<2x16xi32>
    %104 = arith.ori %100, %103 : vector<2x16xi1>
    %c8_i32_20 = arith.constant 8 : i32
    %105 = vector.broadcast %c8_i32_20 : i32 to vector<2x16xi32>
    %106 = arith.addi %91, %105 : vector<2x16xi32>
    %107 = arith.cmpi eq, %90, %106 : vector<2x16xi32>
    %108 = arith.ori %104, %107 : vector<2x16xi1>
    %c10_i32_21 = arith.constant 10 : i32
    %109 = vector.broadcast %c10_i32_21 : i32 to vector<2x16xi32>
    %110 = arith.addi %91, %109 : vector<2x16xi32>
    %111 = arith.cmpi eq, %90, %110 : vector<2x16xi32>
    %112 = arith.ori %108, %111 : vector<2x16xi1>
    %c12_i32_22 = arith.constant 12 : i32
    %113 = vector.broadcast %c12_i32_22 : i32 to vector<2x16xi32>
    %114 = arith.addi %91, %113 : vector<2x16xi32>
    %115 = arith.cmpi eq, %90, %114 : vector<2x16xi32>
    %116 = arith.ori %112, %115 : vector<2x16xi1>
    %c14_i32_23 = arith.constant 14 : i32
    %117 = vector.broadcast %c14_i32_23 : i32 to vector<2x16xi32>
    %118 = arith.addi %91, %117 : vector<2x16xi32>
    %119 = arith.cmpi eq, %90, %118 : vector<2x16xi32>
    %120 = arith.ori %116, %119 : vector<2x16xi1>
    %121 = arith.extui %120 : vector<2x16xi1> to vector<2x16xi32>
    %122 = arith.sitofp %121 : vector<2x16xi32> to vector<2x16xf32>
    %cst_24 = arith.constant dense<0.000000e+00> : vector<16x32xf32>
    %123 = tpu.matmul %89, %55, %cst_24 {dimension_numbers = #tpu.dot_dimension_numbers<[1], [0], [0], [1], [0, 0, 1, 1], [], []>} : vector<16x2xf32>, vector<2x32xf32>, vector<16x32xf32> -> vector<16x32xf32>
    %124 = arith.mulf %123, %56 : vector<16x32xf32>
    %cst_25 = arith.constant dense<0.000000e+00> : vector<16xf32>
    %125 = vector.multi_reduction <add>, %124, %cst_25 [1] : vector<16x32xf32> to vector<16xf32>
    %126 = vector.shape_cast %125 : vector<16xf32> to vector<16x1xf32>
    %cst_26 = arith.constant dense<0xFF800000> : vector<1xf32>
    %127 = vector.multi_reduction <maximumf>, %126, %cst_26 [0] : vector<16x1xf32> to vector<1xf32>
    %128 = vector.shape_cast %127 : vector<1xf32> to vector<1x1xf32>
    %129 = vector.broadcast %128 : vector<1x1xf32> to vector<16x1xf32>
    %130 = arith.subf %126, %129 : vector<16x1xf32>
    %131 = math.exp %130 : vector<16x1xf32>
    %132 = vector.broadcast %131 : vector<16x1xf32> to vector<16x32xf32>
    %133 = arith.mulf %132, %56 : vector<16x32xf32>
    %cst_27 = arith.constant dense<0.000000e+00> : vector<2x32xf32>
    %134 = tpu.matmul %122, %133, %cst_27 {dimension_numbers = #tpu.dot_dimension_numbers<[1], [0], [0], [1], [0, 0, 1, 1], [], []>} : vector<2x16xf32>, vector<16x32xf32>, vector<2x32xf32> -> vector<2x32xf32>
    %cst_28 = arith.constant dense<0.000000e+00> : vector<2x1xf32>
    %135 = tpu.matmul %122, %131, %cst_28 {dimension_numbers = #tpu.dot_dimension_numbers<[1], [0], [0], [1], [0, 0, 1, 1], [], []>} : vector<2x16xf32>, vector<16x1xf32>, vector<2x1xf32> -> vector<2x1xf32>
    %136 = vector.broadcast %135 : vector<2x1xf32> to vector<2x32xf32>
    %137 = arith.divf %134, %136 : vector<2x32xf32>
    %138 = tpu.concatenate %55, %137 in 1 : vector<2x32xf32>, vector<2x32xf32> -> vector<2x64xf32>
    %c0_29 = arith.constant 0 : index
    %c0_30 = arith.constant 0 : index
    %139 = vector.load %arg6[%c0_29, %c0_30] : memref<65x32xf32, #tpu.memory_space<vmem>>, vector<64x32xf32>
    %cst_31 = arith.constant dense<0.000000e+00> : vector<2x32xf32>
    %140 = tpu.matmul %138, %139, %cst_31 {dimension_numbers = #tpu.dot_dimension_numbers<[1], [0], [0], [1], [0, 0, 1, 1], [], []>} : vector<2x64xf32>, vector<64x32xf32>, vector<2x32xf32> -> vector<2x32xf32>
    %c64_32 = arith.constant 64 : index
    %c0_33 = arith.constant 0 : index
    %141 = vector.load %arg6[%c64_32, %c0_33] : memref<65x32xf32, #tpu.memory_space<vmem>>, vector<1x32xf32>
    %142 = vector.broadcast %141 : vector<1x32xf32> to vector<2x32xf32>
    %143 = arith.addf %140, %142 : vector<2x32xf32>
    %144 = math.tanh %143 : vector<2x32xf32>
    %c0_34 = arith.constant 0 : index
    %c0_35 = arith.constant 0 : index
    %145 = vector.load %arg7[%c0_34, %c0_35] : memref<33x128xf32, #tpu.memory_space<vmem>>, vector<32x128xf32>
    %cst_36 = arith.constant dense<0.000000e+00> : vector<2x128xf32>
    %146 = tpu.matmul %144, %145, %cst_36 {dimension_numbers = #tpu.dot_dimension_numbers<[1], [0], [0], [1], [0, 0, 1, 1], [], []>} : vector<2x32xf32>, vector<32x128xf32>, vector<2x128xf32> -> vector<2x128xf32>
    %c32_37 = arith.constant 32 : index
    %c0_38 = arith.constant 0 : index
    %147 = vector.load %arg7[%c32_37, %c0_38] : memref<33x128xf32, #tpu.memory_space<vmem>>, vector<1x128xf32>
    %148 = vector.broadcast %147 : vector<1x128xf32> to vector<2x128xf32>
    %149 = arith.addf %146, %148 : vector<2x128xf32>
    %cst_39 = arith.constant dense<0xFF800000> : vector<2xf32>
    %150 = vector.multi_reduction <maximumf>, %149, %cst_39 [1] : vector<2x128xf32> to vector<2xf32>
    %151 = vector.shape_cast %150 : vector<2xf32> to vector<2x1xf32>
    %152 = vector.broadcast %151 : vector<2x1xf32> to vector<2x128xf32>
    %153 = arith.subf %149, %152 : vector<2x128xf32>
    %154 = math.exp %153 : vector<2x128xf32>
    %cst_40 = arith.constant dense<0.000000e+00> : vector<2xf32>
    %155 = vector.multi_reduction <add>, %154, %cst_40 [1] : vector<2x128xf32> to vector<2xf32>
    %156 = vector.shape_cast %155 : vector<2xf32> to vector<2x1xf32>
    %157 = vector.broadcast %156 : vector<2x1xf32> to vector<2x128xf32>
    %158 = arith.divf %154, %157 : vector<2x128xf32>
    %c0_41 = arith.constant 0 : index
    %c0_42 = arith.constant 0 : index
    %c0_43 = arith.constant 0 : index
    %159 = vector.load %arg8[%c0_41, %c0_42, %c0_43] : memref<1x2x128xf32, #tpu.memory_space<vmem>>, vector<1x2x128xf32>
    %160 = vector.shape_cast %159 : vector<1x2x128xf32> to vector<2x128xf32>
    %161 = vector.shape_cast %158 : vector<2x128xf32> to vector<1x2x128xf32>
    tpu.vector_store %arg8[%c0_41, %c0_42, %c0_43], %161 {strides = array<i32>} : memref<1x2x128xf32, #tpu.memory_space<vmem>>, vector<1x2x128xf32>,
    %c0_44 = arith.constant 0 : index
    %c0_45 = arith.constant 0 : index
    %c0_46 = arith.constant 0 : index
    %162 = vector.load %arg9[%c0_44, %c0_45, %c0_46] : memref<1x2x32xf32, #tpu.memory_space<vmem>>, vector<1x2x32xf32>
    %163 = vector.shape_cast %162 : vector<1x2x32xf32> to vector<2x32xf32>
    %164 = vector.shape_cast %55 : vector<2x32xf32> to vector<1x2x32xf32>
    tpu.vector_store %arg9[%c0_44, %c0_45, %c0_46], %164 {strides = array<i32>} : memref<1x2x32xf32, #tpu.memory_space<vmem>>, vector<1x2x32xf32>,
    %c0_47 = arith.constant 0 : index
    %c0_48 = arith.constant 0 : index
    %165 = vector.load %arg10[%c0_47, %c0_48] : memref<2x32xf32, #tpu.memory_space<vmem>>, vector<2x32xf32>
    tpu.vector_store %arg10[%c0_47, %c0_48], %55 {strides = array<i32>} : memref<2x32xf32, #tpu.memory_space<vmem>>, vector<2x32xf32>,
    return
  }
  func.func @transform_0(%arg0: i32, %arg1: memref<1x2xi32, #tpu.memory_space<smem>>) -> (i32, i32, i32) {
    %c0_i32 = arith.constant 0 : i32
    %c0_i32_0 = arith.constant 0 : i32
    %c0_i32_1 = arith.constant 0 : i32
    %c0_i32_2 = arith.constant 0 : i32
    return %c0_i32, %c0_i32_0, %c0_i32_1 : i32, i32, i32
  }
  func.func @transform_1(%arg0: i32, %arg1: memref<1x2xi32, #tpu.memory_space<smem>>) -> (i32, i32) {
    %c0_i32 = arith.constant 0 : i32
    %c0_i32_0 = arith.constant 0 : i32
    %c0_i32_1 = arith.constant 0 : i32
    return %c0_i32, %c0_i32_0 : i32, i32
  }
  func.func @transform_2(%arg0: i32, %arg1: memref<1x2xi32, #tpu.memory_space<smem>>) -> (i32, i32) {
    %c0_i32 = arith.constant 0 : i32
    %c0_i32_0 = arith.constant 0 : i32
    %c0_i32_1 = arith.constant 0 : i32
    return %c0_i32, %c0_i32_0 : i32, i32
  }
  func.func @transform_3(%arg0: i32, %arg1: memref<1x2xi32, #tpu.memory_space<smem>>) -> (i32, i32) {
    %c0_i32 = arith.constant 0 : i32
    %c0_i32_0 = arith.constant 0 : i32
    %c0_i32_1 = arith.constant 0 : i32
    return %c0_i32, %c0_i32_0 : i32, i32
  }
  func.func @transform_4(%arg0: i32, %arg1: memref<1x2xi32, #tpu.memory_space<smem>>) -> (i32, i32) {
    %c0_i32 = arith.constant 0 : i32
    %c0_i32_0 = arith.constant 0 : i32
    %c0_i32_1 = arith.constant 0 : i32
    return %c0_i32, %c0_i32_0 : i32, i32
  }
  func.func @transform_5(%arg0: i32, %arg1: memref<1x2xi32, #tpu.memory_space<smem>>) -> (i32, i32) {
    %c0_i32 = arith.constant 0 : i32
    %c0_i32_0 = arith.constant 0 : i32
    %c0_i32_1 = arith.constant 0 : i32
    return %c0_i32, %c0_i32_0 : i32, i32
  }
  func.func @transform_6(%arg0: i32, %arg1: memref<1x2xi32, #tpu.memory_space<smem>>) -> (i32, i32, i32) {
    %c0_i32 = arith.constant 0 : i32
    %c0_i32_0 = arith.constant 0 : i32
    %c0_i32_1 = arith.constant 0 : i32
    return %arg0, %c0_i32, %c0_i32_0 : i32, i32, i32
  }
  func.func @transform_7(%arg0: i32, %arg1: memref<1x2xi32, #tpu.memory_space<smem>>) -> (i32, i32, i32) {
    %c0_i32 = arith.constant 0 : i32
    %c0_i32_0 = arith.constant 0 : i32
    %c0_i32_1 = arith.constant 0 : i32
    %c0_i32_2 = arith.constant 0 : i32
    return %c0_i32, %c0_i32_0, %c0_i32_1 : i32, i32, i32
  }
}

</mosaic_0001>

<llo_original>
// kernel: tpu_custom_call.1
$region0: #{tpu_custom_call.1}
  #allocation0 [shape = 'u32[]', space=smem, size = 0x4, offset = 0x4, fixed_abs, tag = 'smem constant byte address 0x4 - core index']
  #allocation1 [shape = 'u32[72,128]{1,0:T(1,128)}', space=vmem, size = 0x9000, scoped, tag = 'internal scratch']
  #allocation2 [shape = 'f32[2,32]{1,0:T(2,128)}', space=vmem, size = 0x400, scoped, tag = 'scratch operand']
  #allocation3 [shape = 's32[1]{0}', space=sflag, size = 0x4, scoped, tag = 'scoped memory for tpu_custom_call.1']
  #allocation4 [shape = 'u8[512]{0}', space=smem, size = 0x200, scoped, tag = 'prefetched SMEM operand 0']
  %s0 = inlined_call_operand.vmem [shape: s32[1,2], index: 0, kind: input, shape index: {}]
  %s1 = inlined_call_operand.vmem [shape: f32[1,2,32], index: 1, kind: input, shape index: {}]
  %s2 = inlined_call_operand.vmem [shape: f32[16,32], index: 2, kind: input, shape index: {}]
  %s3 = inlined_call_operand.vmem [shape: f32[128,32], index: 3, kind: input, shape index: {}]
  %s4 = inlined_call_operand.vmem [shape: f32[66,96], index: 4, kind: input, shape index: {}]
  %s5 = inlined_call_operand.vmem [shape: f32[65,32], index: 5, kind: input, shape index: {}]
  %s6 = inlined_call_operand.vmem [shape: f32[33,128], index: 6, kind: input, shape index: {}]
  %s7 = inlined_call_operand.hbm [shape: f32[1,2,128], index: 7, kind: output, shape index: {0}]
  %s8 = inlined_call_operand.hbm [shape: f32[1,2,32], index: 8, kind: output, shape index: {1}]
  %9 = xla_tuple %s7, %s8
  %s10 = sld [smem:[#allocation0]]
  $region46: #{tpu_custom_call.1} parent=0
    _
  %s12 = ssub.s32 1, %s10
  %s13 = scalar_select 0, %s12, %s10
  %s15 = sshll.u32 %s0, 4
  %s16 = int_to_ptr.vmem [resolvable:$true] %s15
  %18 = dma.vmem_to_smem %s16, 16, [#allocation4], [#allocation3]
  %20 = dma.done [#allocation3], 16
  %21 = sfence
  $region1: #{tpu_custom_call.1} parent=0
    #allocation5 [shape = 'u8[1024]{0}', space=vmem, size = 0x400, scoped, tag = 'output window, operand 0, single buffered']
    #allocation6 [shape = 's32[1]{0}', space=sflag, size = 0x4, scoped, tag = 'scoped memory for tpu_custom_call.1']
    #allocation7 [shape = 'u8[1024]{0}', space=vmem, size = 0x400, scoped, tag = 'output window, operand 1, single buffered']
    #allocation8 [shape = 's32[1]{0}', space=sflag, size = 0x4, scoped, tag = 'scoped memory for tpu_custom_call.1']
    %22 = vsyncpa [#allocation6], 0
    %23 = vsyncpa [#allocation8], 0
    // Predicated region
    $region2: #{tpu_custom_call.1} parent=1 // pred_check
      _
    $region3: #{tpu_custom_call.1} parent=1 // pred_check_branch
      %25 = sbr.rel (0) target = $region5
    $region4: #{tpu_custom_call.1} parent=1 // pred_region
      _
    $region5: #{tpu_custom_call.1} parent=1 // pred_fallthru
      _
    // Predicated region
    $region6: #{tpu_custom_call.1} parent=1 // pred_check
      _
    $region7: #{tpu_custom_call.1} parent=1 // pred_check_branch
      %27 = sbr.rel (0) target = $region9
    $region8: #{tpu_custom_call.1} parent=1 // pred_region
      _
    $region9: #{tpu_custom_call.1} parent=1 // pred_fallthru
      _
    // Predicated region
    $region10: #{tpu_custom_call.1} parent=1 // pred_check
      _
    $region11: #{tpu_custom_call.1} parent=1 // pred_check_branch
      %29 = sbr.rel (0) target = $region13
    $region12: #{tpu_custom_call.1} parent=1 // pred_region
      _
    $region13: #{tpu_custom_call.1} parent=1 // pred_fallthru
      _
    // Predicated region
    $region14: #{tpu_custom_call.1} parent=1 // pred_check
      _
    $region15: #{tpu_custom_call.1} parent=1 // pred_check_branch
      %31 = sbr.rel (0) target = $region17
    $region16: #{tpu_custom_call.1} parent=1 // pred_region
      _
    $region17: #{tpu_custom_call.1} parent=1 // pred_fallthru
      _
    // Predicated region
    $region18: #{tpu_custom_call.1} parent=1 // pred_check
      _
    $region19: #{tpu_custom_call.1} parent=1 // pred_check_branch
      %33 = sbr.rel (0) target = $region21
    $region20: #{tpu_custom_call.1} parent=1 // pred_region
      _
    $region21: #{tpu_custom_call.1} parent=1 // pred_fallthru
      _
    // Predicated region
    $region22: #{tpu_custom_call.1} parent=1 // pred_check
      _
    $region23: #{tpu_custom_call.1} parent=1 // pred_check_branch
      %35 = sbr.rel (0) target = $region25
    $region24: #{tpu_custom_call.1} parent=1 // pred_region
      _
    $region25: #{tpu_custom_call.1} parent=1 // pred_fallthru
      _
    %p36 = scmp.eq.s32.totalorder 0, 0
    // Predicated region
    $region26: #{tpu_custom_call.1} parent=1 // pred_check
      %p37 = pneg %p36
    $region27: #{tpu_custom_call.1} parent=1 // pred_check_branch
      %39 = sbr.rel (%p37) target = $region29
    $region28: #{tpu_custom_call.1} parent=1 // pred_region
      %v40 = vld [vmem:[%s1] sm:$0x3]
      %vm41 = vcmask 254976
      %42 = vst.msk [vmem:[#allocation2] sm:$0x3] %vm41, %v40
    $region29: #{tpu_custom_call.1} parent=1 // pred_fallthru
      _
    %v43 = vlaneseq
    %v44 = vand.u32 %v43, 127
    %s45 = smul.u32 0, 128
    %s46 = sld [smem:[#allocation4 + %s45]]
    %v47 = vstv %s46
    %vm48 = vcmp.eq.s32.totalorder %v44, %v47
    %v49 = vsel %vm48, 1, 0
    %v50 = vcvt.s32.f32 %v49
    %s51 = sadd.s32 %s45, 1
    %s52 = sld [smem:[#allocation4 + %s51]]
    %v53 = vstv %s52
    %vm54 = vcmp.eq.s32.totalorder %v44, %v53
    %v55 = vsel %vm54, 1, 0
    %v56 = vcvt.s32.f32 %v55
    %vm57 = vcmask 1040384
    %v58 = vsel %vm57, %v50, %v56
    %v59 = vld [vmem:[%s3] sm:$0xff]
    %v60 = vld [vmem:[%s3 + $0x8] sm:$0xff]
    %v61 = vld [vmem:[%s3 + $0x10] sm:$0xff]
    %v62 = vld [vmem:[%s3 + $0x18] sm:$0xff]
    %v63 = vld [vmem:[%s3 + $0x20] sm:$0xff]
    %v64 = vld [vmem:[%s3 + $0x28] sm:$0xff]
    %v65 = vld [vmem:[%s3 + $0x30] sm:$0xff]
    %v66 = vld [vmem:[%s3 + $0x38] sm:$0xff]
    %v67 = vld [vmem:[%s3 + $0x40] sm:$0xff]
    %v68 = vld [vmem:[%s3 + $0x48] sm:$0xff]
    %v69 = vld [vmem:[%s3 + $0x50] sm:$0xff]
    %v70 = vld [vmem:[%s3 + $0x58] sm:$0xff]
    %v71 = vld [vmem:[%s3 + $0x60] sm:$0xff]
    %v72 = vld [vmem:[%s3 + $0x68] sm:$0xff]
    %v73 = vld [vmem:[%s3 + $0x70] sm:$0xff]
    %v74 = vld [vmem:[%s3 + $0x78] sm:$0xff]
    %75 = vmatpush.msra.mxu0 %v74
    %76 = vmatpush.msra.mxu0 %v73
    %77 = vmatpush.msra.mxu0 %v72
    %78 = vmatpush.msra.mxu0 %v71
    %79 = vmatpush.msra.mxu0 %v70
    %80 = vmatpush.msra.mxu0 %v69
    %81 = vmatpush.msra.mxu0 %v68
    %82 = vmatpush.msra.mxu0 %v67
    %83 = vmatpush.msra.mxu0 %v66
    %84 = vmatpush.msra.mxu0 %v65
    %85 = vmatpush.msra.mxu0 %v64
    %86 = vmatpush.msra.mxu0 %v63
    %87 = vmatpush.msra.mxu0 %v62
    %88 = vmatpush.msra.mxu0 %v61
    %89 = vmatpush.msra.mxu0 %v60
    %90 = vmatpush.msra.mxu0 %v59
    %91 = vmatmul.f32.gmra.mxu0 %v58
    %v92 = vpop.f32.mrf.mxu0
    %v93 = vadd.f32 0.0, %v92
    %94 = vdwg.mxu0
    %v95 = vld [vmem:[#allocation2] sm:$0x3]
    %v96 = vld [vmem:[%s4] sm:$0xff]
    %v97 = vld [vmem:[%s4 + $0x8] sm:$0xff]
    %v98 = vld [vmem:[%s4 + $0x10] sm:$0xff]
    %v99 = vld [vmem:[%s4 + $0x18] sm:$0xff]
    %v100 = vld [vmem:[%s4 + $0x40] sm:$0x1]
    %v101 = vperm.slane %v100, 0
    %vm102 = vcmask 261120
    %v104 = vsel %vm102, %v93, 0
    %106 = vmatpush.msra.mxu0 0.0
    %107 = vmatpush.msra.mxu0 0.0
    %108 = vmatpush.msra.mxu0 0.0
    %109 = vmatpush.msra.mxu0 0.0
    %110 = vmatpush.msra.mxu0 0.0
    %111 = vmatpush.msra.mxu0 0.0
    %112 = vmatpush.msra.mxu0 0.0
    %113 = vmatpush.msra.mxu0 0.0
    %114 = vmatpush.msra.mxu0 0.0
    %115 = vmatpush.msra.mxu0 0.0
    %116 = vmatpush.msra.mxu0 0.0
    %117 = vmatpush.msra.mxu0 0.0
    %118 = vmatpush.msra.mxu0 %v99
    %119 = vmatpush.msra.mxu0 %v98
    %120 = vmatpush.msra.mxu0 %v97
    %121 = vmatpush.msra.mxu0 %v96
    %122 = vmatmul.f32.gmra.mxu0 %v104
    %v123 = vpop.f32.mrf.mxu0
    %v124 = vadd.f32 %v101, %v123
    %125 = vdwg.mxu0
    %v126 = vld [vmem:[%s4 + $0x20] sm:$0xff]
    %v127 = vld [vmem:[%s4 + $0x28] sm:$0xff]
    %v128 = vld [vmem:[%s4 + $0x30] sm:$0xff]
    %v129 = vld [vmem:[%s4 + $0x38] sm:$0xff]
    %v130 = vld [vmem:[%s4 + $0x41] sm:$0x1]
    %v131 = vperm.slane %v130, 0
    %v133 = vsel %vm102, %v95, 0
    %135 = vmatpush.msra.mxu0 0.0
    %136 = vmatpush.msra.mxu0 0.0
    %137 = vmatpush.msra.mxu0 0.0
    %138 = vmatpush.msra.mxu0 0.0
    %139 = vmatpush.msra.mxu0 0.0
    %140 = vmatpush.msra.mxu0 0.0
    %141 = vmatpush.msra.mxu0 0.0
    %142 = vmatpush.msra.mxu0 0.0
    %143 = vmatpush.msra.mxu0 0.0
    %144 = vmatpush.msra.mxu0 0.0
    %145 = vmatpush.msra.mxu0 0.0
    %146 = vmatpush.msra.mxu0 0.0
    %147 = vmatpush.msra.mxu0 %v129
    %148 = vmatpush.msra.mxu0 %v128
    %149 = vmatpush.msra.mxu0 %v127
    %150 = vmatpush.msra.mxu0 %v126
    %151 = vmatmul.f32.gmra.mxu0 %v133
    %v152 = vpop.f32.mrf.mxu0
    %v153 = vadd.f32 %v131, %v152
    %154 = vdwg.mxu0
    %v155 = vadd.f32 %v124, %v153
    %v156 = vxor.u32 %v155, 2147483648
    %v157 = vmul.f32 %v156, 1.442695
    %v158 = vpow.pop %v157
    %v159 = vadd.f32 %v158, 1.0
    %v160 = vrcp.pop %v159
    %v161 = vmul.f32 %v159, %v160
    %v162 = vsub.f32 1.0, %v161
    %v163 = vmul.f32 %v160, %v162
    %v164 = vadd.f32 %v160, %v163
    %vm165 = vweird.f32 %v159
    %vm166 = vweird.f32 %v160
    %vm167 = vmor %vm165, %vm166
    %v168 = vsel %vm167, %v160, %v164
    %v169 = vand.u32 2147483647, %v159
    %vm170 = vcmp.eq.f32.partialorder %v169, 8.507059e+37
    %v171 = vand.u32 %v159, 2147483648
    %v172 = vor.u32 1.1754944e-38, %v171
    %v173 = vsel %vm170, %v172, %v168
    %v174 = vmul.f32 1.0, %v173
    %176 = vrot.lane.b32.xlu0 %v153, 64
    %v177 = vpop.permute.xlu0 %176
    %v179 = vmul.f32 %v174, %v177
    %181 = vrot.lane.b32.xlu0 %v179, 64
    %v182 = vpop.permute.xlu0 %181
    %v184 = vadd.f32 %v124, %v182
    %v185 = vtanh.pop %v184
    %v186 = vsub.f32 1.0, %v174
    %188 = vrot.lane.b32.xlu0 %v185, 96
    %v189 = vpop.permute.xlu0 %188
    %v191 = vmul.f32 %v186, %v189
    %192 = vrot.lane.b32.xlu0 %v95, 32
    %v193 = vpop.permute.xlu0 %192
    %v195 = vmul.f32 %v174, %v193
    %v196 = vadd.f32 %v191, %v195
    %v197 = vld [vmem:[%s2] sm:$0xff]
    %v198 = vld [vmem:[%s2 + $0x8] sm:$0xff]
    %v199 = vlaneseq
    %v200 = vshrl.u32 %v199, 7
    %v201 = vadd.s32 %v200, 8
    %vm202 = vcmp.eq.s32.totalorder %v200, %v44
    %vm203 = vcmp.eq.s32.totalorder %v201, %v44
    %v204 = vadd.s32 %v44, 2
    %vm205 = vcmp.eq.s32.totalorder %v200, %v204
    %vm206 = vcmp.eq.s32.totalorder %v201, %v204
    %vm207 = vmor %vm202, %vm205
    %vm208 = vmor %vm203, %vm206
    %v209 = vadd.s32 %v44, 4
    %vm210 = vcmp.eq.s32.totalorder %v200, %v209
    %vm211 = vcmp.eq.s32.totalorder %v201, %v209
    %vm212 = vmor %vm207, %vm210
    %vm213 = vmor %vm208, %vm211
    %v214 = vadd.s32 %v44, 6
    %vm215 = vcmp.eq.s32.totalorder %v200, %v214
    %vm216 = vcmp.eq.s32.totalorder %v201, %v214
    %vm217 = vmor %vm212, %vm215
    %vm218 = vmor %vm213, %vm216
    %v219 = vadd.s32 %v44, 8
    %vm220 = vcmp.eq.s32.totalorder %v200, %v219
    %vm221 = vcmp.eq.s32.totalorder %v201, %v219
    %vm222 = vmor %vm217, %vm220
    %vm223 = vmor %vm218, %vm221
    %v224 = vadd.s32 %v44, 10
    %vm225 = vcmp.eq.s32.totalorder %v200, %v224
    %vm226 = vcmp.eq.s32.totalorder %v201, %v224
    %vm227 = vmor %vm222, %vm225
    %vm228 = vmor %vm223, %vm226
    %v229 = vadd.s32 %v44, 12
    %vm230 = vcmp.eq.s32.totalorder %v200, %v229
    %vm231 = vcmp.eq.s32.totalorder %v201, %v229
    %vm232 = vmor %vm227, %vm230
    %vm233 = vmor %vm228, %vm231
    %v234 = vadd.s32 %v44, 14
    %vm235 = vcmp.eq.s32.totalorder %v200, %v234
    %vm236 = vcmp.eq.s32.totalorder %v201, %v234
    %vm237 = vmor %vm232, %vm235
    %vm238 = vmor %vm233, %vm236
    %v239 = vsel %vm237, 1, 0
    %v240 = vsel %vm238, 1, 0
    %v241 = vcvt.s32.f32 %v239
    %v242 = vcvt.s32.f32 %v240
    %vm243 = vcmp.eq.s32.totalorder %v44, %v200
    %v244 = vadd.s32 %v200, 2
    %vm245 = vcmp.eq.s32.totalorder %v44, %v244
    %vm246 = vmor %vm243, %vm245
    %v247 = vadd.s32 %v200, 4
    %vm248 = vcmp.eq.s32.totalorder %v44, %v247
    %vm249 = vmor %vm246, %vm248
    %v250 = vadd.s32 %v200, 6
    %vm251 = vcmp.eq.s32.totalorder %v44, %v250
    %vm252 = vmor %vm249, %vm251
    %vm253 = vcmp.eq.s32.totalorder %v44, %v201
    %vm254 = vmor %vm252, %vm253
    %v255 = vadd.s32 %v200, 10
    %vm256 = vcmp.eq.s32.totalorder %v44, %v255
    %vm257 = vmor %vm254, %vm256
    %v258 = vadd.s32 %v200, 12
    %vm259 = vcmp.eq.s32.totalorder %v44, %v258
    %vm260 = vmor %vm257, %vm259
    %v261 = vadd.s32 %v200, 14
    %vm262 = vcmp.eq.s32.totalorder %v44, %v261
    %vm263 = vmor %vm260, %vm262
    %v264 = vsel %vm263, 1, 0
    %v265 = vcvt.s32.f32 %v264
    %267 = vrot.lane.b32.xlu0 %v196, 96
    %v268 = vpop.permute.xlu0 %267
    %vm269 = vcmask 15360
    %v271 = vsel %vm269, %v241, 0
    %v274 = vsel %vm269, %v242, 0
    %vm276 = vcmask 1041408
    %v277 = vsel %vm276, %v268, 0
    %279 = vmatpush.msra.mxu0 0.0
    %280 = vmatpush.msra.mxu0 0.0
    %281 = vmatpush.msra.mxu0 0.0
    %282 = vmatpush.msra.mxu0 0.0
    %283 = vmatpush.msra.mxu0 0.0
    %284 = vmatpush.msra.mxu0 0.0
    %285 = vmatpush.msra.mxu0 0.0
    %286 = vmatpush.msra.mxu0 0.0
    %287 = vmatpush.msra.mxu0 0.0
    %288 = vmatpush.msra.mxu0 0.0
    %289 = vmatpush.msra.mxu0 0.0
    %290 = vmatpush.msra.mxu0 0.0
    %291 = vmatpush.msra.mxu0 0.0
    %292 = vmatpush.msra.mxu0 0.0
    %293 = vmatpush.msra.mxu0 0.0
    %294 = vmatpush.msra.mxu0 %v277
    %295 = vmatmul.f32.gmra.mxu0 %v271
    %v296 = vpop.f32.mrf.mxu0
    %v297 = vadd.f32 0.0, %v296
    %298 = vmatmul.f32.gmra.mxu0 %v274
    %v299 = vpop.f32.mrf.mxu0
    %v300 = vadd.f32 0.0, %v299
    %301 = vdwg.mxu0
    %v302 = vmul.f32 %v297, %v197
    %v303 = vmul.f32 %v300, %v198
    %v304 = vsel %vm102, %v302, 0.0
    %305 = vadd.xlane.f32.xlu0 %v304
    %v306 = vpop.xlane.xlu0 %305
    %v307 = vsel %vm102, %v303, 0.0
    %308 = vadd.xlane.f32.xlu0 %v307
    %v309 = vpop.xlane.xlu0 %308
    %v310 = vmax.f32 %v306, %v309
    %v311 = vrot.slane %v310, 4
    %v312 = vmax.f32 %v310, %v311
    %v313 = vrot.slane %v312, 2
    %v314 = vmax.f32 %v312, %v313
    %v315 = vrot.slane %v314, 1
    %v316 = vmax.f32 %v314, %v315
    %v317 = vsub.f32 %v306, %v316
    %v318 = vsub.f32 %v309, %v316
    %v319 = vmul.f32 %v317, 1.442695
    %v320 = vpow.pop %v319
    %v321 = vmul.f32 %v318, 1.442695
    %v322 = vpow.pop %v321
    %v323 = vmul.f32 %v320, %v197
    %v324 = vmul.f32 %v322, %v198
    %vm325 = vcmask 130048
    %v327 = vsel %vm325, %v265, 0
    %329 = vmatpush.msra.mxu0 0.0
    %330 = vmatpush.msra.mxu0 0.0
    %331 = vmatpush.msra.mxu0 0.0
    %332 = vmatpush.msra.mxu0 0.0
    %333 = vmatpush.msra.mxu0 0.0
    %334 = vmatpush.msra.mxu0 0.0
    %335 = vmatpush.msra.mxu0 0.0
    %336 = vmatpush.msra.mxu0 0.0
    %337 = vmatpush.msra.mxu0 0.0
    %338 = vmatpush.msra.mxu0 0.0
    %339 = vmatpush.msra.mxu0 0.0
    %340 = vmatpush.msra.mxu0 0.0
    %341 = vmatpush.msra.mxu0 0.0
    %342 = vmatpush.msra.mxu0 0.0
    %343 = vmatpush.msra.mxu0 %v324
    %344 = vmatpush.msra.mxu0 %v323
    %345 = vmatmul.f32.gmra.mxu0 %v327
    %v346 = vpop.f32.mrf.mxu0
    %v347 = vadd.f32 0.0, %v346
    %348 = vdwg.mxu0
    %349 = vmatpush.msra.mxu0 0.0
    %350 = vmatpush.msra.mxu0 0.0
    %351 = vmatpush.msra.mxu0 0.0
    %352 = vmatpush.msra.mxu0 0.0
    %353 = vmatpush.msra.mxu0 0.0
    %354 = vmatpush.msra.mxu0 0.0
    %355 = vmatpush.msra.mxu0 0.0
    %356 = vmatpush.msra.mxu0 0.0
    %357 = vmatpush.msra.mxu0 0.0
    %358 = vmatpush.msra.mxu0 0.0
    %359 = vmatpush.msra.mxu0 0.0
    %360 = vmatpush.msra.mxu0 0.0
    %361 = vmatpush.msra.mxu0 0.0
    %362 = vmatpush.msra.mxu0 0.0
    %363 = vmatpush.msra.mxu0 %v322
    %364 = vmatpush.msra.mxu0 %v320
    %365 = vmatmul.f32.gmra.mxu0 %v327
    %v366 = vpop.f32.mrf.mxu0
    %v367 = vadd.f32 0.0, %v366
    %368 = vdwg.mxu0
    %370 = vset.pattern.permute.xlu0 0
    %371 = vperm.xlu0 %370, %v367
    %v372 = vpop.permute.xlu0 %371
    %v374 = vrcp.pop %v372
    %v375 = vmul.f32 %v372, %v374
    %v376 = vsub.f32 1.0, %v375
    %v377 = vmul.f32 %v374, %v376
    %v378 = vadd.f32 %v374, %v377
    %vm379 = vweird.f32 %v372
    %vm380 = vweird.f32 %v374
    %vm381 = vmor %vm379, %vm380
    %v382 = vsel %vm381, %v374, %v378
    %v383 = vand.u32 2147483647, %v372
    %vm384 = vcmp.eq.f32.partialorder %v383, 8.507059e+37
    %v385 = vand.u32 %v372, 2147483648
    %v386 = vor.u32 1.1754944e-38, %v385
    %v387 = vsel %vm384, %v386, %v382
    %v388 = vmul.f32 %v347, %v387
    %391 = vrot.lane.b32.xlu0 %v388, 32
    %v392 = vpop.permute.xlu0 %391
    %v394 = vsel %vm102, %v268, %v392
    %v395 = vld [vmem:[%s5] sm:$0xff]
    %v396 = vld [vmem:[%s5 + $0x8] sm:$0xff]
    %v397 = vld [vmem:[%s5 + $0x10] sm:$0xff]
    %v398 = vld [vmem:[%s5 + $0x18] sm:$0xff]
    %v399 = vld [vmem:[%s5 + $0x20] sm:$0xff]
    %v400 = vld [vmem:[%s5 + $0x28] sm:$0xff]
    %v401 = vld [vmem:[%s5 + $0x30] sm:$0xff]
    %v402 = vld [vmem:[%s5 + $0x38] sm:$0xff]
    %v403 = vld [vmem:[%s5 + $0x40] sm:$0x1]
    %v404 = vperm.slane %v403, 0
    %vm405 = vcmask 523264
    %v407 = vsel %vm405, %v394, 0
    %409 = vmatpush.msra.mxu0 0.0
    %410 = vmatpush.msra.mxu0 0.0
    %411 = vmatpush.msra.mxu0 0.0
    %412 = vmatpush.msra.mxu0 0.0
    %413 = vmatpush.msra.mxu0 0.0
    %414 = vmatpush.msra.mxu0 0.0
    %415 = vmatpush.msra.mxu0 0.0
    %416 = vmatpush.msra.mxu0 0.0
    %417 = vmatpush.msra.mxu0 %v402
    %418 = vmatpush.msra.mxu0 %v401
    %419 = vmatpush.msra.mxu0 %v400
    %420 = vmatpush.msra.mxu0 %v399
    %421 = vmatpush.msra.mxu0 %v398
    %422 = vmatpush.msra.mxu0 %v397
    %423 = vmatpush.msra.mxu0 %v396
    %424 = vmatpush.msra.mxu0 %v395
    %425 = vmatmul.f32.gmra.mxu0 %v407
    %v426 = vpop.f32.mrf.mxu0
    %v427 = vadd.f32 %v404, %v426
    %428 = vdwg.mxu0
    %v429 = vtanh.pop %v427
    %v430 = vld [vmem:[%s6] sm:$0xff]
    %v431 = vld [vmem:[%s6 + $0x8] sm:$0xff]
    %v432 = vld [vmem:[%s6 + $0x10] sm:$0xff]
    %v433 = vld [vmem:[%s6 + $0x18] sm:$0xff]
    %v434 = vld [vmem:[%s6 + $0x20] sm:$0x1]
    %v435 = vperm.slane %v434, 0
    %v437 = vsel %vm102, %v429, 0
    %439 = vmatpush.msra.mxu0 0.0
    %440 = vmatpush.msra.mxu0 0.0
    %441 = vmatpush.msra.mxu0 0.0
    %442 = vmatpush.msra.mxu0 0.0
    %443 = vmatpush.msra.mxu0 0.0
    %444 = vmatpush.msra.mxu0 0.0
    %445 = vmatpush.msra.mxu0 0.0
    %446 = vmatpush.msra.mxu0 0.0
    %447 = vmatpush.msra.mxu0 0.0
    %448 = vmatpush.msra.mxu0 0.0
    %449 = vmatpush.msra.mxu0 0.0
    %450 = vmatpush.msra.mxu0 0.0
    %451 = vmatpush.msra.mxu0 %v433
    %452 = vmatpush.msra.mxu0 %v432
    %453 = vmatpush.msra.mxu0 %v431
    %454 = vmatpush.msra.mxu0 %v430
    %455 = vmatmul.f32.gmra.mxu0 %v437
    %v456 = vpop.f32.mrf.mxu0
    %v457 = vadd.f32 %v435, %v456
    %458 = vdwg.mxu0
    %v459 = vsel %vm276, %v457, -inf
    %460 = vmax.xlane.f32.xlu0 %v459
    %v461 = vpop.xlane.xlu0 %460
    %v462 = vsub.f32 %v457, %v461
    %v463 = vmul.f32 %v462, 1.442695
    %v464 = vpow.pop %v463
    %v465 = vsel %vm276, %v464, 0.0
    %466 = vadd.xlane.f32.xlu0 %v465
    %v467 = vpop.xlane.xlu0 %466
    %v468 = vrcp.pop %v467
    %v469 = vmul.f32 %v467, %v468
    %v470 = vsub.f32 1.0, %v469
    %v471 = vmul.f32 %v468, %v470
    %v472 = vadd.f32 %v468, %v471
    %vm473 = vweird.f32 %v467
    %vm474 = vweird.f32 %v468
    %vm475 = vmor %vm473, %vm474
    %v476 = vsel %vm475, %v468, %v472
    %v477 = vand.u32 2147483647, %v467
    %vm478 = vcmp.eq.f32.partialorder %v477, 8.507059e+37
    %v479 = vand.u32 %v467, 2147483648
    %v480 = vor.u32 1.1754944e-38, %v479
    %v481 = vsel %vm478, %v480, %v476
    %v482 = vmul.f32 %v464, %v481
    %483 = vst [vmem:[#allocation5] sm:$0x3] %v482
    %vm484 = vcmask 254976
    %485 = vst.msk [vmem:[#allocation7] sm:$0x3] %vm484, %v268
    %486 = vst.msk [vmem:[#allocation2] sm:$0x3] %vm484, %v268
    // Predicated region
    $region30: #{tpu_custom_call.1} parent=1 // pred_check
      _
    $region31: #{tpu_custom_call.1} parent=1 // pred_check_branch
      %488 = sbr.rel (0) target = $region33
    $region32: #{tpu_custom_call.1} parent=1 // pred_region
      %490 = vsyncadd [#allocation6], 0
      %s492 = sshll.u32 [#allocation5], 4
      %s493 = int_to_ptr.vmem [resolvable:$true] %s492
      %s494 = sshll.u32 %s7, 4
      %s495 = int_to_ptr.hbm [resolvable:$true] %s494
      %497 = dma.vmem_to_hbm [thread:$0]  %s493, 32, %s495, [#allocation6]
    $region33: #{tpu_custom_call.1} parent=1 // pred_fallthru
      _
    // Predicated region
    $region34: #{tpu_custom_call.1} parent=1 // pred_check
      _
    $region35: #{tpu_custom_call.1} parent=1 // pred_check_branch
      %499 = sbr.rel (0) target = $region37
    $region36: #{tpu_custom_call.1} parent=1 // pred_region
      %501 = vsyncadd [#allocation8], 0
      %s503 = sshll.u32 [#allocation7], 4
      %s504 = int_to_ptr.vmem [resolvable:$true] %s503
      %s505 = sshll.u32 %s8, 4
      %s506 = int_to_ptr.hbm [resolvable:$true] %s505
      %508 = dma.vmem_to_hbm [thread:$0]  %s504, 32, %s506, [#allocation8]
    $region37: #{tpu_custom_call.1} parent=1 // pred_fallthru
      _
    // Predicated region
    $region38: #{tpu_custom_call.1} parent=1 // pred_check
      _
    $region39: #{tpu_custom_call.1} parent=1 // pred_check_branch
      %510 = sbr.rel (0) target = $region41
    $region40: #{tpu_custom_call.1} parent=1 // pred_region
      %512 = dma.done [#allocation6], 32
    $region41: #{tpu_custom_call.1} parent=1 // pred_fallthru
      _
    // Predicated region
    $region42: #{tpu_custom_call.1} parent=1 // pred_check
      _
    $region43: #{tpu_custom_call.1} parent=1 // pred_check_branch
      %514 = sbr.rel (0) target = $region45
    $region44: #{tpu_custom_call.1} parent=1 // pred_region
      %516 = dma.done [#allocation8], 32
    $region45: #{tpu_custom_call.1} parent=1 // pred_fallthru
      _
    %517 = vsyncpa [#allocation6], 1
    %518 = vsyncpa [#allocation8], 1

</llo_original>
